<compile_context>
chip_gen: v6e
topology: v6e:2x2x1
jax: 0.10.0
libtpu: 0.0.40
codegen_flags: <defaults>
</compile_context>

<pallas_src>
import jax
import jax.numpy as jnp
from jax.experimental import pallas as pl
from jax.experimental.pallas import tpu as pltpu


def _pad_to(n, m):
    return -(-n // m) * m


def _nn_attention_kernel(x_ref, wa1_ref, ba1_ref, wa2_ref,
                         w1_ref, b1_ref, w2_ref, b2_ref, out_ref):
    TB, S, D = x_ref.shape

    x = x_ref[...]                                     # (TB, S, D), ingest dtype

    # --- attention scoring MLP: contraction over D, f32 accumulation --------
    h = jax.lax.dot_general(
        x, wa1_ref[...],
        dimension_numbers=(((2,), (0,)), ((), ())),
        preferred_element_type=jnp.float32) + ba1_ref[...]           # (TB, S, H)
    h = jnp.tanh(h)

    # width-1 score head on the VPU (lane reduce).  The score-head bias (ba2)
    # is constant per row and cancels in the softmax over S -> dropped.
    scores = jnp.sum(h * wa2_ref[...], axis=-1)                      # (TB, S) f32

    # --- softmax over the sequence axis (dim=1), exact reciprocal -----------
    m = jnp.max(scores, axis=1, keepdims=True)                       # (TB, 1)
    e = jnp.exp(scores - m)                                          # (TB, S)
    attn_w = e / jnp.sum(e, axis=1, keepdims=True)                   # (TB, S)

    # --- attended values: sum_s attn_w[b,s] * x[b,s,:] -----------------------
    # S-step static FMA accumulation: no f32 materialization of x, no
    # (TB, S, D) broadcast temporary.  S is small for this module.
    # TODO(synk): for large S switch to a lax.fori_loop / chunked accumulation.
    attended = jnp.zeros((TB, D), jnp.float32)
    for s in range(S):
        attended = attended + attn_w[:, s:s + 1] * x[:, s, :].astype(jnp.float32)

    # --- head MLP: Linear(D,H) -> relu -> Linear(H,1) ------------------------
    z = jnp.dot(attended.astype(w1_ref.dtype), w1_ref[...],
                preferred_element_type=jnp.float32) + b1_ref[...]    # (TB, H)
    z = jnp.maximum(z, 0.0)
    out = jnp.sum(z * w2_ref[...], axis=-1) + b2_ref[0]              # (TB,)

    # lane-dense store: (1, TB) with TB on the 128-lane axis
    out_ref[...] = out[None, :].astype(out_ref.dtype)


def _per_row_vmem_bytes(S, D, H, itemsize):
    """Lane/sublane-padding-aware VMEM bytes per batch row inside the kernel."""
    return (2 * _pad_to(S, 8) * _pad_to(D, 128) * itemsize   # x block (double-buffered)
            + _pad_to(S, 8) * _pad_to(H, 128) * 4            # h (f32)
            + 4 * _pad_to(S, 128) * 4                        # scores / exp / attn_w
            + 4 * _pad_to(max(D, H), 128) * 4)               # attended / z / temps


def nn_attention_forward(x, params, *, block_b=None, compute_dtype="auto"):
    """x: (B, S, D). params: see init_params. Returns (B, 1) float32.

    compute_dtype: "auto" (default) uses bf16 ingest of x and the two (D, H)
    weights on the large-B (memory-bound) path, f32 otherwise.  Softmax and
    all accumulation stay f32.
    """
    B, S, D = x.shape
    H = params['wa1'].shape[1]

    if compute_dtype == "auto":
        compute_dtype = jnp.bfloat16 if B >= 256 else None

    if compute_dtype is not None:
        x_in = x.astype(compute_dtype)
        wa1 = params['wa1'].astype(compute_dtype)
        w1 = params['w1'].astype(compute_dtype)
    else:
        x_in, wa1, w1 = x, params['wa1'], params['w1']

    ba1 = params['ba1'].astype(jnp.float32)                    # (1, H)
    wa2_row = params['wa2'].reshape(1, H).astype(jnp.float32)  # (1, H)
    b1 = params['b1'].astype(jnp.float32)                      # (1, H)
    w2_row = params['w2'].reshape(1, H).astype(jnp.float32)    # (1, H)
    b2 = params['b2'].reshape(-1).astype(jnp.float32)          # (1,) scalar -> SMEM

    itemsize = x_in.dtype.itemsize
    per_row = _per_row_vmem_bytes(S, D, H, itemsize)

    if block_b is None:
        if B <= 128:
            block_b = B
        else:
            # Conservative VMEM budget that also fits v7x's 64 MiB VMEM.
            budget = 40 * 1024 * 1024
            cap = max(128, (budget // per_row) // 128 * 128)
            block_b = min(2048, cap)
            # Keep >= 2 grid steps so both v7x TensorCores' DMA engines pull
            # from HBM (a grid of 1 guarantees single-core execution).
            two_step = max(128, ((B // 2) // 128) * 128)
            block_b = min(block_b, two_step)
    assert block_b == B or block_b % 128 == 0, \
        "block_b must be B or a multiple of 128 (lane-dense output)"

    nb = pl.cdiv(B, block_b)
    B_pad = nb * block_b
    if B_pad != B:
        # Pad the batch instead of rejecting non-multiple B; padded rows are
        # computed (finite garbage) and sliced off below.
        x_in = jnp.pad(x_in, ((0, B_pad - B), (0, 0), (0, 0)))

    # Padding-aware VMEM footprint / limit.
    w_bytes = sum(int(a.size) * a.dtype.itemsize
                  for a in (wa1, w1, ba1, wa2_row, b1, w2_row))
    footprint = (per_row * block_b
                 + 2 * w_bytes
                 + 2 * 8 * _pad_to(block_b, 128) * 4)          # double-buffered out
    vmem_limit = int(min(max(2 * footprint, 16 * 1024 * 1024), 48 * 1024 * 1024))

    # Advisory cost estimate: this kernel is HBM-bound on every generation.
    flops = (2 * B_pad * S * D * H       # score MLP matmul
             + 2 * B_pad * S * H         # score head
             + 2 * B_pad * S * D         # attended weighted sum
             + 2 * B_pad * D * H         # fc1
             + 2 * B_pad * H)            # fc2
    transcendentals = B_pad * S * H + B_pad * S      # tanh + exp
    bytes_accessed = int(x_in.size * itemsize + w_bytes + 4 + B_pad * 4)
    cost = pl.CostEstimate(flops=flops, transcendentals=transcendentals,
                           bytes_accessed=bytes_accessed)

    out = pl.pallas_call(
        _nn_attention_kernel,
        out_shape=jax.ShapeDtypeStruct((1, B_pad), jnp.float32),
        grid=(nb,),
        in_specs=[
            pl.BlockSpec((block_b, S, D), lambda i: (i, 0, 0)),   # x: batch-tiled
            pl.BlockSpec((D, H), lambda i: (0, 0)),               # wa1 (resident)
            pl.BlockSpec((1, H), lambda i: (0, 0)),               # ba1
            pl.BlockSpec((1, H), lambda i: (0, 0)),               # wa2 (row)
            pl.BlockSpec((D, H), lambda i: (0, 0)),               # w1
            pl.BlockSpec((1, H), lambda i: (0, 0)),               # b1
            pl.BlockSpec((1, H), lambda i: (0, 0)),               # w2 (row)
            pl.BlockSpec(memory_space=pltpu.MemorySpace.SMEM),    # b2 scalar
        ],
        out_specs=pl.BlockSpec((1, block_b), lambda i: (0, i)),   # lane-dense
        compiler_params=pltpu.CompilerParams(
            dimension_semantics=("parallel",),
            vmem_limit_bytes=vmem_limit),
        cost_estimate=cost,
    )(x_in, wa1, ba1, wa2_row, w1, b1, w2_row, b2)

    return out[0, :B].reshape(B, 1)


def init_params(key, input_dim, hidden_dim):
    ks = jax.random.split(key, 8)
    s = 0.1
    return {
        # attention scoring MLP
        'wa1': jax.random.normal(ks[0], (input_dim, hidden_dim), jnp.float32) * s,
        'ba1': jax.random.normal(ks[1], (1, hidden_dim), jnp.float32) * s,
        'wa2': jax.random.normal(ks[2], (hidden_dim, 1), jnp.float32) * s,
        'ba2': jax.random.normal(ks[3], (1, 1), jnp.float32) * s,
        # head MLP
        'w1': jax.random.normal(ks[4], (input_dim, hidden_dim), jnp.float32) * s,
        'b1': jax.random.normal(ks[5], (1, hidden_dim), jnp.float32) * s,
        'w2': jax.random.normal(ks[6], (hidden_dim, 1), jnp.float32) * s,
        'b2': jax.random.normal(ks[7], (1, 1), jnp.float32) * s,
    }


def reference_forward(x, p):
    """Pure-JAX reference mirroring the PyTorch module semantics exactly."""
    h = jnp.tanh(jnp.einsum('bsd,dh->bsh', x, p['wa1']) + p['ba1'])
    scores = jnp.einsum('bsh,ho->bso', h, p['wa2']) + p['ba2'][0, 0]   # (B, S, 1)
    w = jax.nn.softmax(scores, axis=1)
    attended = jnp.sum(w * x, axis=1)                                  # (B, D)
    z = jnp.maximum(attended @ p['w1'] + p['b1'], 0.0)
    return z @ p['w2'] + p['b2'][0, 0]


if __name__ == "__main__":
    B, S, D, H = 2, 8, 32, 32

    key = jax.random.PRNGKey(0)
    kx, kp = jax.random.split(key)
    x = jax.random.normal(kx, (B, S, D), jnp.float32)
    params = init_params(kp, D, H)

    # Small-B path: single grid step, full f32.
    out = jax.block_until_ready(nn_attention_forward(x, params))
    ref = reference_forward(x, params)
    assert out.shape == (B, 1)
    assert jnp.allclose(out, ref, rtol=2e-3, atol=2e-3), (out, ref)

    # Large-B path: batch tiling (grid > 1) + bf16 ingest (memory-bound path).
    B2 = 384
    x2 = jax.random.normal(jax.random.PRNGKey(1), (B2, S, D), jnp.float32)
    out2 = jax.block_until_ready(nn_attention_forward(x2, params))
    ref2 = reference_forward(x2, params)
    assert out2.shape == (B2, 1)
    # bf16 ingest of x rounds before both the scores and the weighted sum.
    assert jnp.allclose(out2, ref2, rtol=5e-2, atol=5e-2), \
        float(jnp.abs(out2 - ref2).max())

    print("KERNEL_OK")
</pallas_src>

<mosaic_0001>
module attributes {stable_mosaic.version = 11 : i64} {
  func.func @_nn_attention_kernel(%arg0: i32, %arg1: memref<2x8x32xf32, #tpu.memory_space<vmem>>, %arg2: memref<32x32xf32, #tpu.memory_space<vmem>>, %arg3: memref<1x32xf32, #tpu.memory_space<vmem>>, %arg4: memref<1x32xf32, #tpu.memory_space<vmem>>, %arg5: memref<32x32xf32, #tpu.memory_space<vmem>>, %arg6: memref<1x32xf32, #tpu.memory_space<vmem>>, %arg7: memref<1x32xf32, #tpu.memory_space<vmem>>, %arg8: memref<1xf32, #tpu.memory_space<smem>>, %arg9: memref<1x2xf32, #tpu.memory_space<vmem>>) attributes {dimension_semantics = [#tpu.dimension_semantics<parallel>], iteration_bounds = array<i64: 1>, scalar_prefetch = 0 : i64, scratch_operands = 0 : i64, tpu.core_type = #tpu.core_type<tc>, window_params = [{transform_indices = @transform_0, window_bounds = array<i64: 2, 8, 32>}, {pipeline_mode = #tpu.pipeline_mode<synchronous>, transform_indices = @transform_1, window_bounds = array<i64: 32, 32>}, {pipeline_mode = #tpu.pipeline_mode<synchronous>, transform_indices = @transform_2, window_bounds = array<i64: 1, 32>}, {pipeline_mode = #tpu.pipeline_mode<synchronous>, transform_indices = @transform_3, window_bounds = array<i64: 1, 32>}, {pipeline_mode = #tpu.pipeline_mode<synchronous>, transform_indices = @transform_4, window_bounds = array<i64: 32, 32>}, {pipeline_mode = #tpu.pipeline_mode<synchronous>, transform_indices = @transform_5, window_bounds = array<i64: 1, 32>}, {pipeline_mode = #tpu.pipeline_mode<synchronous>, transform_indices = @transform_6, window_bounds = array<i64: 1, 32>}, {transform_indices = @transform_7, window_bounds = array<i64: 1>}, {transform_indices = @transform_8, window_bounds = array<i64: 1, 2>}]} {
    %c0 = arith.constant 0 : index
    %c0_0 = arith.constant 0 : index
    %c0_1 = arith.constant 0 : index
    %0 = vector.load %arg1[%c0, %c0_0, %c0_1] : memref<2x8x32xf32, #tpu.memory_space<vmem>>, vector<2x8x32xf32>
    %c0_2 = arith.constant 0 : index
    %c0_3 = arith.constant 0 : index
    %1 = vector.load %arg2[%c0_2, %c0_3] : memref<32x32xf32, #tpu.memory_space<vmem>>, vector<32x32xf32>
    %cst = arith.constant dense<0.000000e+00> : vector<2x8x32xf32>
    %2 = tpu.matmul %0, %1, %cst {dimension_numbers = #tpu.dot_dimension_numbers<[2], [0], [0, 1], [1], [0, 0, 0, 1, 1, 1], [], []>} : vector<2x8x32xf32>, vector<32x32xf32>, vector<2x8x32xf32> -> vector<2x8x32xf32>
    %c0_4 = arith.constant 0 : index
    %c0_5 = arith.constant 0 : index
    %3 = vector.load %arg3[%c0_4, %c0_5] : memref<1x32xf32, #tpu.memory_space<vmem>>, vector<1x32xf32>
    %4 = vector.shape_cast %3 : vector<1x32xf32> to vector<1x1x32xf32>
    %5 = vector.broadcast %4 : vector<1x1x32xf32> to vector<2x8x32xf32>
    %6 = arith.addf %2, %5 : vector<2x8x32xf32>
    %7 = math.tanh %6 : vector<2x8x32xf32>
    %c0_6 = arith.constant 0 : index
    %c0_7 = arith.constant 0 : index
    %8 = vector.load %arg4[%c0_6, %c0_7] : memref<1x32xf32, #tpu.memory_space<vmem>>, vector<1x32xf32>
    %9 = vector.shape_cast %8 : vector<1x32xf32> to vector<1x1x32xf32>
    %10 = vector.broadcast %9 : vector<1x1x32xf32> to vector<2x8x32xf32>
    %11 = arith.mulf %7, %10 : vector<2x8x32xf32>
    %cst_8 = arith.constant dense<0.000000e+00> : vector<2x8xf32>
    %12 = vector.multi_reduction <add>, %11, %cst_8 [2] : vector<2x8x32xf32> to vector<2x8xf32>
    %cst_9 = arith.constant dense<0xFF800000> : vector<2xf32>
    %13 = vector.multi_reduction <maximumf>, %12, %cst_9 [1] : vector<2x8xf32> to vector<2xf32>
    %14 = vector.shape_cast %13 : vector<2xf32> to vector<2x1xf32>
    %15 = vector.broadcast %14 : vector<2x1xf32> to vector<2x8xf32>
    %16 = arith.subf %12, %15 : vector<2x8xf32>
    %17 = math.exp %16 : vector<2x8xf32>
    %cst_10 = arith.constant dense<0.000000e+00> : vector<2xf32>
    %18 = vector.multi_reduction <add>, %17, %cst_10 [1] : vector<2x8xf32> to vector<2xf32>
    %19 = vector.shape_cast %18 : vector<2xf32> to vector<2x1xf32>
    %20 = vector.broadcast %19 : vector<2x1xf32> to vector<2x8xf32>
    %21 = arith.divf %17, %20 : vector<2x8xf32>
    %cst_11 = arith.constant 0.000000e+00 : f32
    %22 = vector.broadcast %cst_11 : f32 to vector<2x32xf32>
    %23 = vector.extract_strided_slice %21 {offsets = [0, 0], sizes = [2, 1], strides = [1, 1]} : vector<2x8xf32> to vector<2x1xf32>
    %24 = vector.extract_strided_slice %0 {offsets = [0, 0, 0], sizes = [2, 1, 32], strides = [1, 1, 1]} : vector<2x8x32xf32> to vector<2x1x32xf32>
    %25 = vector.shape_cast %24 : vector<2x1x32xf32> to vector<2x32xf32>
    %26 = vector.broadcast %23 : vector<2x1xf32> to vector<2x32xf32>
    %27 = arith.mulf %26, %25 : vector<2x32xf32>
    %28 = arith.addf %22, %27 : vector<2x32xf32>
    %29 = vector.extract_strided_slice %21 {offsets = [0, 1], sizes = [2, 1], strides = [1, 1]} : vector<2x8xf32> to vector<2x1xf32>
    %30 = vector.extract_strided_slice %0 {offsets = [0, 1, 0], sizes = [2, 1, 32], strides = [1, 1, 1]} : vector<2x8x32xf32> to vector<2x1x32xf32>
    %31 = vector.shape_cast %30 : vector<2x1x32xf32> to vector<2x32xf32>
    %32 = vector.broadcast %29 : vector<2x1xf32> to vector<2x32xf32>
    %33 = arith.mulf %32, %31 : vector<2x32xf32>
    %34 = arith.addf %28, %33 : vector<2x32xf32>
    %35 = vector.extract_strided_slice %21 {offsets = [0, 2], sizes = [2, 1], strides = [1, 1]} : vector<2x8xf32> to vector<2x1xf32>
    %36 = vector.extract_strided_slice %0 {offsets = [0, 2, 0], sizes = [2, 1, 32], strides = [1, 1, 1]} : vector<2x8x32xf32> to vector<2x1x32xf32>
    %37 = vector.shape_cast %36 : vector<2x1x32xf32> to vector<2x32xf32>
    %38 = vector.broadcast %35 : vector<2x1xf32> to vector<2x32xf32>
    %39 = arith.mulf %38, %37 : vector<2x32xf32>
    %40 = arith.addf %34, %39 : vector<2x32xf32>
    %41 = vector.extract_strided_slice %21 {offsets = [0, 3], sizes = [2, 1], strides = [1, 1]} : vector<2x8xf32> to vector<2x1xf32>
    %42 = vector.extract_strided_slice %0 {offsets = [0, 3, 0], sizes = [2, 1, 32], strides = [1, 1, 1]} : vector<2x8x32xf32> to vector<2x1x32xf32>
    %43 = vector.shape_cast %42 : vector<2x1x32xf32> to vector<2x32xf32>
    %44 = vector.broadcast %41 : vector<2x1xf32> to vector<2x32xf32>
    %45 = arith.mulf %44, %43 : vector<2x32xf32>
    %46 = arith.addf %40, %45 : vector<2x32xf32>
    %47 = vector.extract_strided_slice %21 {offsets = [0, 4], sizes = [2, 1], strides = [1, 1]} : vector<2x8xf32> to vector<2x1xf32>
    %48 = vector.extract_strided_slice %0 {offsets = [0, 4, 0], sizes = [2, 1, 32], strides = [1, 1, 1]} : vector<2x8x32xf32> to vector<2x1x32xf32>
    %49 = vector.shape_cast %48 : vector<2x1x32xf32> to vector<2x32xf32>
    %50 = vector.broadcast %47 : vector<2x1xf32> to vector<2x32xf32>
    %51 = arith.mulf %50, %49 : vector<2x32xf32>
    %52 = arith.addf %46, %51 : vector<2x32xf32>
    %53 = vector.extract_strided_slice %21 {offsets = [0, 5], sizes = [2, 1], strides = [1, 1]} : vector<2x8xf32> to vector<2x1xf32>
    %54 = vector.extract_strided_slice %0 {offsets = [0, 5, 0], sizes = [2, 1, 32], strides = [1, 1, 1]} : vector<2x8x32xf32> to vector<2x1x32xf32>
    %55 = vector.shape_cast %54 : vector<2x1x32xf32> to vector<2x32xf32>
    %56 = vector.broadcast %53 : vector<2x1xf32> to vector<2x32xf32>
    %57 = arith.mulf %56, %55 : vector<2x32xf32>
    %58 = arith.addf %52, %57 : vector<2x32xf32>
    %59 = vector.extract_strided_slice %21 {offsets = [0, 6], sizes = [2, 1], strides = [1, 1]} : vector<2x8xf32> to vector<2x1xf32>
    %60 = vector.extract_strided_slice %0 {offsets = [0, 6, 0], sizes = [2, 1, 32], strides = [1, 1, 1]} : vector<2x8x32xf32> to vector<2x1x32xf32>
    %61 = vector.shape_cast %60 : vector<2x1x32xf32> to vector<2x32xf32>
    %62 = vector.broadcast %59 : vector<2x1xf32> to vector<2x32xf32>
    %63 = arith.mulf %62, %61 : vector<2x32xf32>
    %64 = arith.addf %58, %63 : vector<2x32xf32>
    %65 = vector.extract_strided_slice %21 {offsets = [0, 7], sizes = [2, 1], strides = [1, 1]} : vector<2x8xf32> to vector<2x1xf32>
    %66 = vector.extract_strided_slice %0 {offsets = [0, 7, 0], sizes = [2, 1, 32], strides = [1, 1, 1]} : vector<2x8x32xf32> to vector<2x1x32xf32>
    %67 = vector.shape_cast %66 : vector<2x1x32xf32> to vector<2x32xf32>
    %68 = vector.broadcast %65 : vector<2x1xf32> to vector<2x32xf32>
    %69 = arith.mulf %68, %67 : vector<2x32xf32>
    %70 = arith.addf %64, %69 : vector<2x32xf32>
    %c0_12 = arith.constant 0 : index
    %c0_13 = arith.constant 0 : index
    %71 = vector.load %arg5[%c0_12, %c0_13] : memref<32x32xf32, #tpu.memory_space<vmem>>, vector<32x32xf32>
    %cst_14 = arith.constant dense<0.000000e+00> : vector<2x32xf32>
    %72 = tpu.matmul %70, %71, %cst_14 {dimension_numbers = #tpu.dot_dimension_numbers<[1], [0], [0], [1], [0, 0, 1, 1], [], []>} : vector<2x32xf32>, vector<32x32xf32>, vector<2x32xf32> -> vector<2x32xf32>
    %c0_15 = arith.constant 0 : index
    %c0_16 = arith.constant 0 : index
    %73 = vector.load %arg6[%c0_15, %c0_16] : memref<1x32xf32, #tpu.memory_space<vmem>>, vector<1x32xf32>
    %74 = vector.broadcast %73 : vector<1x32xf32> to vector<2x32xf32>
    %75 = arith.addf %72, %74 : vector<2x32xf32>
    %cst_17 = arith.constant 0.000000e+00 : f32
    %76 = vector.broadcast %cst_17 : f32 to vector<2x32xf32>
    %77 = arith.maximumf %75, %76 : vector<2x32xf32>
    %c0_18 = arith.constant 0 : index
    %c0_19 = arith.constant 0 : index
    %78 = vector.load %arg7[%c0_18, %c0_19] : memref<1x32xf32, #tpu.memory_space<vmem>>, vector<1x32xf32>
    %79 = vector.broadcast %78 : vector<1x32xf32> to vector<2x32xf32>
    %80 = arith.mulf %77, %79 : vector<2x32xf32>
    %cst_20 = arith.constant dense<0.000000e+00> : vector<2xf32>
    %81 = vector.multi_reduction <add>, %80, %cst_20 [1] : vector<2x32xf32> to vector<2xf32>
    %c0_21 = arith.constant 0 : index
    %82 = memref.load %arg8[%c0_21] : memref<1xf32, #tpu.memory_space<smem>>
    %83 = vector.broadcast %82 : f32 to vector<2xf32>
    %84 = arith.addf %81, %83 : vector<2xf32>
    %85 = vector.shape_cast %84 : vector<2xf32> to vector<1x2xf32>
    %c0_22 = arith.constant 0 : index
    %c0_23 = arith.constant 0 : index
    %86 = vector.load %arg9[%c0_22, %c0_23] : memref<1x2xf32, #tpu.memory_space<vmem>>, vector<1x2xf32>
    tpu.vector_store %arg9[%c0_22, %c0_23], %85 {strides = array<i32>} : memref<1x2xf32, #tpu.memory_space<vmem>>, vector<1x2xf32>,
    return
  }
  func.func @transform_0(%arg0: i32) -> (i32, i32, i32) {
    %c0_i32 = arith.constant 0 : i32
    %c0_i32_0 = arith.constant 0 : i32
    %c0_i32_1 = arith.constant 0 : i32
    return %arg0, %c0_i32, %c0_i32_0 : i32, i32, i32
  }
  func.func @transform_1(%arg0: i32) -> (i32, i32) {
    %c0_i32 = arith.constant 0 : i32
    %c0_i32_0 = arith.constant 0 : i32
    %c0_i32_1 = arith.constant 0 : i32
    return %c0_i32, %c0_i32_0 : i32, i32
  }
  func.func @transform_2(%arg0: i32) -> (i32, i32) {
    %c0_i32 = arith.constant 0 : i32
    %c0_i32_0 = arith.constant 0 : i32
    %c0_i32_1 = arith.constant 0 : i32
    return %c0_i32, %c0_i32_0 : i32, i32
  }
  func.func @transform_3(%arg0: i32) -> (i32, i32) {
    %c0_i32 = arith.constant 0 : i32
    %c0_i32_0 = arith.constant 0 : i32
    %c0_i32_1 = arith.constant 0 : i32
    return %c0_i32, %c0_i32_0 : i32, i32
  }
  func.func @transform_4(%arg0: i32) -> (i32, i32) {
    %c0_i32 = arith.constant 0 : i32
    %c0_i32_0 = arith.constant 0 : i32
    %c0_i32_1 = arith.constant 0 : i32
    return %c0_i32, %c0_i32_0 : i32, i32
  }
  func.func @transform_5(%arg0: i32) -> (i32, i32) {
    %c0_i32 = arith.constant 0 : i32
    %c0_i32_0 = arith.constant 0 : i32
    %c0_i32_1 = arith.constant 0 : i32
    return %c0_i32, %c0_i32_0 : i32, i32
  }
  func.func @transform_6(%arg0: i32) -> (i32, i32) {
    %c0_i32 = arith.constant 0 : i32
    %c0_i32_0 = arith.constant 0 : i32
    %c0_i32_1 = arith.constant 0 : i32
    return %c0_i32, %c0_i32_0 : i32, i32
  }
  func.func @transform_7(%arg0: i32) -> i32 {
    %c0_i32 = arith.constant 0 : i32
    %c0_i32_0 = arith.constant 0 : i32
    return %c0_i32 : i32
  }
  func.func @transform_8(%arg0: i32) -> (i32, i32) {
    %c0_i32 = arith.constant 0 : i32
    %c0_i32_0 = arith.constant 0 : i32
    return %c0_i32, %arg0 : i32, i32
  }
}

</mosaic_0001>

<llo_original>
// kernel: tpu_custom_call.1
$region0: #{tpu_custom_call.1}
  #allocation0 [shape = 'u32[]', space=smem, size = 0x4, offset = 0x4, fixed_abs, tag = 'smem constant byte address 0x4 - core index']
  #allocation1 [shape = 'u32[144,128]{1,0:T(1,128)}', space=vmem, size = 0x12000, scoped, tag = 'internal scratch']
  #allocation2 [shape = 'f32[1]{0:T(128)S(6)}', space=smem, size = 0x200, scoped, tag = 'scoped memory for tpu_custom_call.1']
  %s0 = inlined_call_operand.hbm [shape: f32[2,8,32], index: 0, kind: input, shape index: {}]
  %s1 = inlined_call_operand.hbm [shape: f32[32,32], index: 1, kind: input, shape index: {}]
  %s2 = inlined_call_operand.vmem [shape: f32[1,32], index: 2, kind: input, shape index: {}]
  %s3 = inlined_call_operand.vmem [shape: f32[1,32], index: 3, kind: input, shape index: {}]
  %s4 = inlined_call_operand.hbm [shape: f32[32,32], index: 4, kind: input, shape index: {}]
  %s5 = inlined_call_operand.vmem [shape: f32[1,32], index: 5, kind: input, shape index: {}]
  %s6 = inlined_call_operand.vmem [shape: f32[1,32], index: 6, kind: input, shape index: {}]
  %s7 = inlined_call_operand.<no memory space> [shape: f32[1], index: 7, kind: input, shape index: {}]
  %s8 = inlined_call_operand.hbm [shape: f32[1,2], index: 8, kind: output, shape index: {}]
  %s9 = sld [smem:[#allocation0]]
  $region54: #{tpu_custom_call.1} parent=0
    _
  %s11 = ssub.s32 1, %s9
  %s12 = scalar_select 0, %s11, %s9
  %13 = sst [smem:[#allocation2]] %s7
  $region1: #{tpu_custom_call.1} parent=0
    #allocation3 [shape = 'u8[8192]{0}', space=vmem, size = 0x2000, scoped, tag = 'input window, operand 0, single buffered']
    #allocation4 [shape = 's32[1]{0}', space=sflag, size = 0x4, scoped, tag = 'scoped memory for tpu_custom_call.1']
    #allocation5 [shape = 's32[1]{0}', space=sflag, size = 0x4, scoped, tag = 'scoped memory for tpu_custom_call.1']
    #allocation6 [shape = 'u8[16384]{0}', space=vmem, size = 0x4000, scoped, tag = 'input window, operand 1, single buffered']
    #allocation7 [shape = 's32[1]{0}', space=sflag, size = 0x4, scoped, tag = 'scoped memory for tpu_custom_call.1']
    #allocation8 [shape = 'u8[16384]{0}', space=vmem, size = 0x4000, scoped, tag = 'input window, operand 4, single buffered']
    #allocation9 [shape = 'u8[512]{0}', space=vmem, size = 0x400, scoped, tag = 'output window, operand 0, single buffered']
    %14 = vsyncpa [#allocation4], 0
    %15 = vsyncpa [#allocation7], 0
    %16 = vsyncpa [#allocation5], 0
    // Predicated region
    $region2: #{tpu_custom_call.1} parent=1 // pred_check
      _
    $region3: #{tpu_custom_call.1} parent=1 // pred_check_branch
      %18 = sbr.rel (0) target = $region5
    $region4: #{tpu_custom_call.1} parent=1 // pred_region
      %s20 = ssub.s32 256, 256
      %21 = vsyncadd [#allocation4], %s20
      %s22 = sshll.u32 [#allocation3], 4
      %s23 = int_to_ptr.vmem [resolvable:$true] %s22
      %28 = dma.hbm_to_vmem [thread:$0]  %s0, 256, %s23, [#allocation4], 128, 128, 8
    $region5: #{tpu_custom_call.1} parent=1 // pred_fallthru
      _
    // Predicated region
    $region6: #{tpu_custom_call.1} parent=1 // pred_check
      _
    $region7: #{tpu_custom_call.1} parent=1 // pred_check_branch
      %30 = sbr.rel (0) target = $region9
    $region8: #{tpu_custom_call.1} parent=1 // pred_region
      %s32 = ssub.s32 512, 512
      %33 = vsyncadd [#allocation7], %s32
      %s34 = sshll.u32 [#allocation6], 4
      %s35 = int_to_ptr.vmem [resolvable:$true] %s34
      %40 = dma.hbm_to_vmem [thread:$0]  %s1, 512, %s35, [#allocation7], 128, 128, 8
    $region9: #{tpu_custom_call.1} parent=1 // pred_fallthru
      _
    // Predicated region
    $region10: #{tpu_custom_call.1} parent=1 // pred_check
      _
    $region11: #{tpu_custom_call.1} parent=1 // pred_check_branch
      %42 = sbr.rel (0) target = $region13
    $region12: #{tpu_custom_call.1} parent=1 // pred_region
      _
    $region13: #{tpu_custom_call.1} parent=1 // pred_fallthru
      _
    // Predicated region
    $region14: #{tpu_custom_call.1} parent=1 // pred_check
      _
    $region15: #{tpu_custom_call.1} parent=1 // pred_check_branch
      %44 = sbr.rel (0) target = $region17
    $region16: #{tpu_custom_call.1} parent=1 // pred_region
      _
    $region17: #{tpu_custom_call.1} parent=1 // pred_fallthru
      _
    // Predicated region
    $region18: #{tpu_custom_call.1} parent=1 // pred_check
      _
    $region19: #{tpu_custom_call.1} parent=1 // pred_check_branch
      %46 = sbr.rel (0) target = $region21
    $region20: #{tpu_custom_call.1} parent=1 // pred_region
      %s48 = ssub.s32 512, 512
      %49 = vsyncadd [#allocation7], %s48
      %s50 = sshll.u32 [#allocation8], 4
      %s51 = int_to_ptr.vmem [resolvable:$true] %s50
      %56 = dma.hbm_to_vmem [thread:$0]  %s4, 512, %s51, [#allocation7], 128, 128, 8
    $region21: #{tpu_custom_call.1} parent=1 // pred_fallthru
      _
    // Predicated region
    $region22: #{tpu_custom_call.1} parent=1 // pred_check
      _
    $region23: #{tpu_custom_call.1} parent=1 // pred_check_branch
      %58 = sbr.rel (0) target = $region25
    $region24: #{tpu_custom_call.1} parent=1 // pred_region
      _
    $region25: #{tpu_custom_call.1} parent=1 // pred_fallthru
      _
    // Predicated region
    $region26: #{tpu_custom_call.1} parent=1 // pred_check
      _
    $region27: #{tpu_custom_call.1} parent=1 // pred_check_branch
      %60 = sbr.rel (0) target = $region29
    $region28: #{tpu_custom_call.1} parent=1 // pred_region
      _
    $region29: #{tpu_custom_call.1} parent=1 // pred_fallthru
      _
    // Predicated region
    $region30: #{tpu_custom_call.1} parent=1 // pred_check
      _
    $region31: #{tpu_custom_call.1} parent=1 // pred_check_branch
      %62 = sbr.rel (0) target = $region33
    $region32: #{tpu_custom_call.1} parent=1 // pred_region
      _
    $region33: #{tpu_custom_call.1} parent=1 // pred_fallthru
      _
    // Predicated region
    $region34: #{tpu_custom_call.1} parent=1 // pred_check
      _
    $region35: #{tpu_custom_call.1} parent=1 // pred_check_branch
      %64 = sbr.rel (0) target = $region37
    $region36: #{tpu_custom_call.1} parent=1 // pred_region
      %65 = dma.done [#allocation4], 256
    $region37: #{tpu_custom_call.1} parent=1 // pred_fallthru
      _
    // Predicated region
    $region38: #{tpu_custom_call.1} parent=1 // pred_check
      _
    $region39: #{tpu_custom_call.1} parent=1 // pred_check_branch
      %67 = sbr.rel (0) target = $region41
    $region40: #{tpu_custom_call.1} parent=1 // pred_region
      %68 = dma.done [#allocation7], 512
    $region41: #{tpu_custom_call.1} parent=1 // pred_fallthru
      _
    // Predicated region
    $region42: #{tpu_custom_call.1} parent=1 // pred_check
      _
    $region43: #{tpu_custom_call.1} parent=1 // pred_check_branch
      %70 = sbr.rel (0) target = $region45
    $region44: #{tpu_custom_call.1} parent=1 // pred_region
      %71 = dma.done [#allocation7], 512
    $region45: #{tpu_custom_call.1} parent=1 // pred_fallthru
      _
    %v72 = vld [vmem:[#allocation3] sm:$0xff]
    %v73 = vld [vmem:[#allocation3 + $0x8] sm:$0xff]
    %v74 = vld [vmem:[#allocation6] sm:$0xff]
    %v75 = vld [vmem:[#allocation6 + $0x8] sm:$0xff]
    %v76 = vld [vmem:[#allocation6 + $0x10] sm:$0xff]
    %v77 = vld [vmem:[#allocation6 + $0x18] sm:$0xff]
    %v78 = vld [vmem:[%s2] sm:$0x1]
    %v80 = vlaneseq
    %v81 = vshrl.u32 %v80, 7
    %v82 = vsub.s32 0, %v81
    %v83 = vrot.slane %v78, %v82
    %vm85 = vcmask 261120
    %v87 = vsel %vm85, %v72, 0
    %v90 = vsel %vm85, %v73, 0
    %92 = vmatprep.subr.mxu0 0.0
    %93 = vmatpush1.msra.mxu0 0.0
    %94 = vmatprep.subr.mxu0 0.0
    %95 = vmatpush1.msra.mxu0 0.0
    %96 = vmatprep.subr.mxu0 0.0
    %97 = vmatpush1.msra.mxu0 0.0
    %98 = vmatprep.subr.mxu0 0.0
    %99 = vmatpush1.msra.mxu0 0.0
    %100 = vmatprep.subr.mxu0 0.0
    %101 = vmatpush1.msra.mxu0 0.0
    %102 = vmatprep.subr.mxu0 0.0
    %103 = vmatpush1.msra.mxu0 0.0
    %104 = vmatprep.subr.mxu0 0.0
    %105 = vmatpush1.msra.mxu0 0.0
    %106 = vmatprep.subr.mxu0 0.0
    %107 = vmatpush1.msra.mxu0 0.0
    %108 = vmatprep.subr.mxu0 0.0
    %109 = vmatpush1.msra.mxu0 0.0
    %110 = vmatprep.subr.mxu0 0.0
    %111 = vmatpush1.msra.mxu0 0.0
    %112 = vmatprep.subr.mxu0 0.0
    %113 = vmatpush1.msra.mxu0 0.0
    %114 = vmatprep.subr.mxu0 0.0
    %115 = vmatpush1.msra.mxu0 0.0
    %116 = vmatprep.subr.mxu0 0.0
    %117 = vmatpush1.msra.mxu0 %v77
    %118 = vmatprep.subr.mxu0 0.0
    %119 = vmatpush1.msra.mxu0 %v76
    %120 = vmatprep.subr.mxu0 0.0
    %121 = vmatpush1.msra.mxu0 %v75
    %122 = vmatprep.subr.mxu0 0.0
    %123 = vmatpush1.msra.mxu0 %v74
    %124 = vmatprep.subr.mxu0 0.0
    %125 = vmatpush2.msra.mxu0 0.0
    %126 = vmatprep.subr.mxu0 0.0
    %127 = vmatpush2.msra.mxu0 0.0
    %128 = vmatprep.subr.mxu0 0.0
    %129 = vmatpush2.msra.mxu0 0.0
    %130 = vmatprep.subr.mxu0 0.0
    %131 = vmatpush2.msra.mxu0 0.0
    %132 = vmatprep.subr.mxu0 0.0
    %133 = vmatpush2.msra.mxu0 0.0
    %134 = vmatprep.subr.mxu0 0.0
    %135 = vmatpush2.msra.mxu0 0.0
    %136 = vmatprep.subr.mxu0 0.0
    %137 = vmatpush2.msra.mxu0 0.0
    %138 = vmatprep.subr.mxu0 0.0
    %139 = vmatpush2.msra.mxu0 0.0
    %140 = vmatprep.subr.mxu0 0.0
    %141 = vmatpush2.msra.mxu0 0.0
    %142 = vmatprep.subr.mxu0 0.0
    %143 = vmatpush2.msra.mxu0 0.0
    %144 = vmatprep.subr.mxu0 0.0
    %145 = vmatpush2.msra.mxu0 0.0
    %146 = vmatprep.subr.mxu0 0.0
    %147 = vmatpush2.msra.mxu0 0.0
    %148 = vmatprep.subr.mxu0 0.0
    %149 = vmatpush2.msra.mxu0 0.0
    %150 = vmatprep.subr.mxu0 0.0
    %151 = vmatpush2.msra.mxu0 0.0
    %152 = vmatprep.subr.mxu0 0.0
    %153 = vmatpush2.msra.mxu0 0.0
    %154 = vmatprep.subr.mxu0 0.0
    %155 = vmatpush2.msra.mxu0 0.0
    %156 = vmatprep.mubr.f32.mxu0 0.0
    %157 = vmatmul.mubr.f32.gmra.mxu0 %v87
    %v158 = vpop.f32.mrf.mxu0
    %v159 = vadd.f32 %v83, %v158
    %v160 = vpop.f32.mrf.mxu0
    %161 = vmatprep.mubr.f32.mxu0 0.0
    %162 = vmatmul.mubr.f32.gmra.mxu0 %v90
    %v163 = vpop.f32.mrf.mxu0
    %v164 = vadd.f32 %v83, %v163
    %v165 = vpop.f32.mrf.mxu0
    %166 = vdwg.mxu0
    %v167 = vtanh.pop %v159
    %v168 = vtanh.pop %v164
    %v169 = vld [vmem:[%s3] sm:$0x1]
    %v171 = vlaneseq
    %v172 = vshrl.u32 %v171, 7
    %v173 = vsub.s32 0, %v172
    %v174 = vrot.slane %v169, %v173
    %v176 = vmul.f32 %v167, %v174
    %v177 = vmul.f32 %v168, %v174
    %v178 = vsel %vm85, %v176, 0.0
    %179 = vadd.xlane.f32.xlu0 %v178
    %v180 = vpop.xlane.xlu0 %179
    %v181 = vsel %vm85, %v177, 0.0
    %182 = vadd.xlane.f32.xlu0 %v181
    %v183 = vpop.xlane.xlu0 %182
    %v186 = vlaneseq
    %v187 = vand.u32 %v186, 127
    %v188 = vlaneseq
    %v189 = vshrl.u32 %v188, 7
    %v190 = vsub.s32 %v187, %v189
    %v191 = vrot.slane %v180, %v190
    %v192 = vlaneseq
    %v193 = vshrl.u32 %v192, 7
    %v194 = vsub.s32 %v187, %v193
    %v195 = vrot.slane %v183, %v194
    %vm196 = vcmask 1041409
    %v197 = vsel %vm196, %v195, %v191
    %vm199 = vcmask 58368
    %v200 = vsel %vm199, %v197, -inf
    %201 = vmax.xlane.f32.xlu0 %v200
    %v202 = vpop.xlane.xlu0 %201
    %v204 = vlaneseq
    %v205 = vshrl.u32 %v204, 7
    %v206 = vsub.s32 0, %v205
    %v207 = vrot.slane %v202, %v206
    %v208 = vlaneseq
    %v209 = vshrl.u32 %v208, 7
    %v210 = vsub.s32 1, %v209
    %v211 = vrot.slane %v202, %v210
    %v214 = vsub.f32 %v180, %v207
    %v215 = vsub.f32 %v183, %v211
    %v216 = vmul.f32 %v214, 1.442695
    %v217 = vpow.pop %v216
    %v218 = vmul.f32 %v215, 1.442695
    %v219 = vpow.pop %v218
    %222 = vset.pattern.permute.xlu0 0
    %223 = vperm.xlu0 %222, %v217
    %v224 = vpop.permute.xlu0 %223
    %225 = vset.pattern.permute.xlu0 0
    %226 = vperm.xlu0 %225, %v219
    %v227 = vpop.permute.xlu0 %226
    %v228 = vlaneseq
    %v229 = vshrl.u32 %v228, 7
    %v230 = vsub.s32 %v187, %v229
    %v231 = vrot.slane %v224, %v230
    %v232 = vlaneseq
    %v233 = vshrl.u32 %v232, 7
    %v234 = vsub.s32 %v187, %v233
    %v235 = vrot.slane %v227, %v234
    %v236 = vsel %vm196, %v235, %v231
    %v238 = vsel %vm199, %v236, 0.0
    %239 = vadd.xlane.f32.xlu0 %v238
    %v240 = vpop.xlane.xlu0 %239
    %v242 = vlaneseq
    %v243 = vshrl.u32 %v242, 7
    %v244 = vsub.s32 0, %v243
    %v245 = vrot.slane %v240, %v244
    %v246 = vlaneseq
    %v247 = vshrl.u32 %v246, 7
    %v248 = vsub.s32 1, %v247
    %v249 = vrot.slane %v240, %v248
    %v252 = vrcp.pop %v245
    %v253 = vmul.f32 %v217, %v252
    %v254 = vrcp.pop %v249
    %v255 = vmul.f32 %v219, %v254
    %v256 = vlaneseq
    %v257 = vshrl.u32 %v256, 7
    %v258 = vsub.s32 0, %v257
    %v259 = vrot.slane %v253, %v258
    %v260 = vlaneseq
    %v261 = vshrl.u32 %v260, 7
    %v262 = vsub.s32 0, %v261
    %v263 = vrot.slane %v255, %v262
    %v264 = vlaneseq
    %v265 = vshrl.u32 %v264, 7
    %v266 = vsub.s32 0, %v265
    %v267 = vrot.slane %v72, %v266
    %269 = vbcast.lane.b32.xlu0 %v267, 256
    %v270 = vpop.permute.xlu0 %269
    %s272 = sor.u32 256, 8
    %273 = vbcast.lane.b32.xlu0 %v267, %s272
    %v274 = vpop.permute.xlu0 %273
    %s276 = sor.u32 256, 16
    %277 = vbcast.lane.b32.xlu0 %v267, %s276
    %v278 = vpop.permute.xlu0 %277
    %s280 = sor.u32 256, 24
    %281 = vbcast.lane.b32.xlu0 %v267, %s280
    %v282 = vpop.permute.xlu0 %281
    %v283 = vlaneseq
    %v284 = vshrl.u32 %v283, 7
    %v285 = vsub.s32 0, %v284
    %v286 = vrot.slane %v73, %v285
    %288 = vbcast.lane.b32.xlu0 %v286, 256
    %v289 = vpop.permute.xlu0 %288
    %s291 = sor.u32 256, 8
    %292 = vbcast.lane.b32.xlu0 %v286, %s291
    %v293 = vpop.permute.xlu0 %292
    %s295 = sor.u32 256, 16
    %296 = vbcast.lane.b32.xlu0 %v286, %s295
    %v297 = vpop.permute.xlu0 %296
    %s299 = sor.u32 256, 24
    %300 = vbcast.lane.b32.xlu0 %v286, %s299
    %v301 = vpop.permute.xlu0 %300
    %v310 = vmul.f32 %v259, %v270
    %v311 = vmul.f32 %v259, %v274
    %v312 = vmul.f32 %v259, %v278
    %v313 = vmul.f32 %v259, %v282
    %v314 = vmul.f32 %v263, %v289
    %v315 = vmul.f32 %v263, %v293
    %v316 = vmul.f32 %v263, %v297
    %v317 = vmul.f32 %v263, %v301
    %v318 = vadd.f32 %v310, 0.0
    %v319 = vadd.f32 %v311, 0.0
    %v320 = vadd.f32 %v312, 0.0
    %v321 = vadd.f32 %v313, 0.0
    %v322 = vadd.f32 %v314, 0.0
    %v323 = vadd.f32 %v315, 0.0
    %v324 = vadd.f32 %v316, 0.0
    %v325 = vadd.f32 %v317, 0.0
    %v326 = vlaneseq
    %v327 = vshrl.u32 %v326, 7
    %v328 = vsub.s32 1, %v327
    %v329 = vrot.slane %v253, %v328
    %v330 = vlaneseq
    %v331 = vshrl.u32 %v330, 7
    %v332 = vsub.s32 1, %v331
    %v333 = vrot.slane %v255, %v332
    %v334 = vlaneseq
    %v335 = vshrl.u32 %v334, 7
    %v336 = vsub.s32 1, %v335
    %v337 = vrot.slane %v72, %v336
    %339 = vbcast.lane.b32.xlu0 %v337, 256
    %v340 = vpop.permute.xlu0 %339
    %s342 = sor.u32 256, 8
    %343 = vbcast.lane.b32.xlu0 %v337, %s342
    %v344 = vpop.permute.xlu0 %343
    %s346 = sor.u32 256, 16
    %347 = vbcast.lane.b32.xlu0 %v337, %s346
    %v348 = vpop.permute.xlu0 %347
    %s350 = sor.u32 256, 24
    %351 = vbcast.lane.b32.xlu0 %v337, %s350
    %v352 = vpop.permute.xlu0 %351
    %v353 = vlaneseq
    %v354 = vshrl.u32 %v353, 7
    %v355 = vsub.s32 1, %v354
    %v356 = vrot.slane %v73, %v355
    %358 = vbcast.lane.b32.xlu0 %v356, 256
    %v359 = vpop.permute.xlu0 %358
    %s361 = sor.u32 256, 8
    %362 = vbcast.lane.b32.xlu0 %v356, %s361
    %v363 = vpop.permute.xlu0 %362
    %s365 = sor.u32 256, 16
    %366 = vbcast.lane.b32.xlu0 %v356, %s365
    %v367 = vpop.permute.xlu0 %366
    %s369 = sor.u32 256, 24
    %370 = vbcast.lane.b32.xlu0 %v356, %s369
    %v371 = vpop.permute.xlu0 %370
    %v380 = vmul.f32 %v329, %v340
    %v381 = vmul.f32 %v329, %v344
    %v382 = vmul.f32 %v329, %v348
    %v383 = vmul.f32 %v329, %v352
    %v384 = vmul.f32 %v333, %v359
    %v385 = vmul.f32 %v333, %v363
    %v386 = vmul.f32 %v333, %v367
    %v387 = vmul.f32 %v333, %v371
    %v388 = vadd.f32 %v318, %v380
    %v389 = vadd.f32 %v319, %v381
    %v390 = vadd.f32 %v320, %v382
    %v391 = vadd.f32 %v321, %v383
    %v392 = vadd.f32 %v322, %v384
    %v393 = vadd.f32 %v323, %v385
    %v394 = vadd.f32 %v324, %v386
    %v395 = vadd.f32 %v325, %v387
    %v396 = vlaneseq
    %v397 = vshrl.u32 %v396, 7
    %v398 = vsub.s32 2, %v397
    %v399 = vrot.slane %v253, %v398
    %v400 = vlaneseq
    %v401 = vshrl.u32 %v400, 7
    %v402 = vsub.s32 2, %v401
    %v403 = vrot.slane %v255, %v402
    %v404 = vlaneseq
    %v405 = vshrl.u32 %v404, 7
    %v406 = vsub.s32 2, %v405
    %v407 = vrot.slane %v72, %v406
    %409 = vbcast.lane.b32.xlu0 %v407, 256
    %v410 = vpop.permute.xlu0 %409
    %s412 = sor.u32 256, 8
    %413 = vbcast.lane.b32.xlu0 %v407, %s412
    %v414 = vpop.permute.xlu0 %413
    %s416 = sor.u32 256, 16
    %417 = vbcast.lane.b32.xlu0 %v407, %s416
    %v418 = vpop.permute.xlu0 %417
    %s420 = sor.u32 256, 24
    %421 = vbcast.lane.b32.xlu0 %v407, %s420
    %v422 = vpop.permute.xlu0 %421
    %v423 = vlaneseq
    %v424 = vshrl.u32 %v423, 7
    %v425 = vsub.s32 2, %v424
    %v426 = vrot.slane %v73, %v425
    %428 = vbcast.lane.b32.xlu0 %v426, 256
    %v429 = vpop.permute.xlu0 %428
    %s431 = sor.u32 256, 8
    %432 = vbcast.lane.b32.xlu0 %v426, %s431
    %v433 = vpop.permute.xlu0 %432
    %s435 = sor.u32 256, 16
    %436 = vbcast.lane.b32.xlu0 %v426, %s435
    %v437 = vpop.permute.xlu0 %436
    %s439 = sor.u32 256, 24
    %440 = vbcast.lane.b32.xlu0 %v426, %s439
    %v441 = vpop.permute.xlu0 %440
    %v450 = vmul.f32 %v399, %v410
    %v451 = vmul.f32 %v399, %v414
    %v452 = vmul.f32 %v399, %v418
    %v453 = vmul.f32 %v399, %v422
    %v454 = vmul.f32 %v403, %v429
    %v455 = vmul.f32 %v403, %v433
    %v456 = vmul.f32 %v403, %v437
    %v457 = vmul.f32 %v403, %v441
    %v458 = vadd.f32 %v388, %v450
    %v459 = vadd.f32 %v389, %v451
    %v460 = vadd.f32 %v390, %v452
    %v461 = vadd.f32 %v391, %v453
    %v462 = vadd.f32 %v392, %v454
    %v463 = vadd.f32 %v393, %v455
    %v464 = vadd.f32 %v394, %v456
    %v465 = vadd.f32 %v395, %v457
    %v466 = vlaneseq
    %v467 = vshrl.u32 %v466, 7
    %v468 = vsub.s32 3, %v467
    %v469 = vrot.slane %v253, %v468
    %v470 = vlaneseq
    %v471 = vshrl.u32 %v470, 7
    %v472 = vsub.s32 3, %v471
    %v473 = vrot.slane %v255, %v472
    %v474 = vlaneseq
    %v475 = vshrl.u32 %v474, 7
    %v476 = vsub.s32 3, %v475
    %v477 = vrot.slane %v72, %v476
    %479 = vbcast.lane.b32.xlu0 %v477, 256
    %v480 = vpop.permute.xlu0 %479
    %s482 = sor.u32 256, 8
    %483 = vbcast.lane.b32.xlu0 %v477, %s482
    %v484 = vpop.permute.xlu0 %483
    %s486 = sor.u32 256, 16
    %487 = vbcast.lane.b32.xlu0 %v477, %s486
    %v488 = vpop.permute.xlu0 %487
    %s490 = sor.u32 256, 24
    %491 = vbcast.lane.b32.xlu0 %v477, %s490
    %v492 = vpop.permute.xlu0 %491
    %v493 = vlaneseq
    %v494 = vshrl.u32 %v493, 7
    %v495 = vsub.s32 3, %v494
    %v496 = vrot.slane %v73, %v495
    %498 = vbcast.lane.b32.xlu0 %v496, 256
    %v499 = vpop.permute.xlu0 %498
    %s501 = sor.u32 256, 8
    %502 = vbcast.lane.b32.xlu0 %v496, %s501
    %v503 = vpop.permute.xlu0 %502
    %s505 = sor.u32 256, 16
    %506 = vbcast.lane.b32.xlu0 %v496, %s505
    %v507 = vpop.permute.xlu0 %506
    %s509 = sor.u32 256, 24
    %510 = vbcast.lane.b32.xlu0 %v496, %s509
    %v511 = vpop.permute.xlu0 %510
    %v520 = vmul.f32 %v469, %v480
    %v521 = vmul.f32 %v469, %v484
    %v522 = vmul.f32 %v469, %v488
    %v523 = vmul.f32 %v469, %v492
    %v524 = vmul.f32 %v473, %v499
    %v525 = vmul.f32 %v473, %v503
    %v526 = vmul.f32 %v473, %v507
    %v527 = vmul.f32 %v473, %v511
    %v528 = vadd.f32 %v458, %v520
    %v529 = vadd.f32 %v459, %v521
    %v530 = vadd.f32 %v460, %v522
    %v531 = vadd.f32 %v461, %v523
    %v532 = vadd.f32 %v462, %v524
    %v533 = vadd.f32 %v463, %v525
    %v534 = vadd.f32 %v464, %v526
    %v535 = vadd.f32 %v465, %v527
    %v536 = vlaneseq
    %v537 = vshrl.u32 %v536, 7
    %v538 = vsub.s32 4, %v537
    %v539 = vrot.slane %v253, %v538
    %v540 = vlaneseq
    %v541 = vshrl.u32 %v540, 7
    %v542 = vsub.s32 4, %v541
    %v543 = vrot.slane %v255, %v542
    %v544 = vlaneseq
    %v545 = vshrl.u32 %v544, 7
    %v546 = vsub.s32 4, %v545
    %v547 = vrot.slane %v72, %v546
    %549 = vbcast.lane.b32.xlu0 %v547, 256
    %v550 = vpop.permute.xlu0 %549
    %s552 = sor.u32 256, 8
    %553 = vbcast.lane.b32.xlu0 %v547, %s552
    %v554 = vpop.permute.xlu0 %553
    %s556 = sor.u32 256, 16
    %557 = vbcast.lane.b32.xlu0 %v547, %s556
    %v558 = vpop.permute.xlu0 %557
    %s560 = sor.u32 256, 24
    %561 = vbcast.lane.b32.xlu0 %v547, %s560
    %v562 = vpop.permute.xlu0 %561
    %v563 = vlaneseq
    %v564 = vshrl.u32 %v563, 7
    %v565 = vsub.s32 4, %v564
    %v566 = vrot.slane %v73, %v565
    %568 = vbcast.lane.b32.xlu0 %v566, 256
    %v569 = vpop.permute.xlu0 %568
    %s571 = sor.u32 256, 8
    %572 = vbcast.lane.b32.xlu0 %v566, %s571
    %v573 = vpop.permute.xlu0 %572
    %s575 = sor.u32 256, 16
    %576 = vbcast.lane.b32.xlu0 %v566, %s575
    %v577 = vpop.permute.xlu0 %576
    %s579 = sor.u32 256, 24
    %580 = vbcast.lane.b32.xlu0 %v566, %s579
    %v581 = vpop.permute.xlu0 %580
    %v590 = vmul.f32 %v539, %v550
    %v591 = vmul.f32 %v539, %v554
    %v592 = vmul.f32 %v539, %v558
    %v593 = vmul.f32 %v539, %v562
    %v594 = vmul.f32 %v543, %v569
    %v595 = vmul.f32 %v543, %v573
    %v596 = vmul.f32 %v543, %v577
    %v597 = vmul.f32 %v543, %v581
    %v598 = vadd.f32 %v528, %v590
    %v599 = vadd.f32 %v529, %v591
    %v600 = vadd.f32 %v530, %v592
    %v601 = vadd.f32 %v531, %v593
    %v602 = vadd.f32 %v532, %v594
    %v603 = vadd.f32 %v533, %v595
    %v604 = vadd.f32 %v534, %v596
    %v605 = vadd.f32 %v535, %v597
    %v606 = vlaneseq
    %v607 = vshrl.u32 %v606, 7
    %v608 = vsub.s32 5, %v607
    %v609 = vrot.slane %v253, %v608
    %v610 = vlaneseq
    %v611 = vshrl.u32 %v610, 7
    %v612 = vsub.s32 5, %v611
    %v613 = vrot.slane %v255, %v612
    %v614 = vlaneseq
    %v615 = vshrl.u32 %v614, 7
    %v616 = vsub.s32 5, %v615
    %v617 = vrot.slane %v72, %v616
    %619 = vbcast.lane.b32.xlu0 %v617, 256
    %v620 = vpop.permute.xlu0 %619
    %s622 = sor.u32 256, 8
    %623 = vbcast.lane.b32.xlu0 %v617, %s622
    %v624 = vpop.permute.xlu0 %623
    %s626 = sor.u32 256, 16
    %627 = vbcast.lane.b32.xlu0 %v617, %s626
    %v628 = vpop.permute.xlu0 %627
    %s630 = sor.u32 256, 24
    %631 = vbcast.lane.b32.xlu0 %v617, %s630
    %v632 = vpop.permute.xlu0 %631
    %v633 = vlaneseq
    %v634 = vshrl.u32 %v633, 7
    %v635 = vsub.s32 5, %v634
    %v636 = vrot.slane %v73, %v635
    %638 = vbcast.lane.b32.xlu0 %v636, 256
    %v639 = vpop.permute.xlu0 %638
    %s641 = sor.u32 256, 8
    %642 = vbcast.lane.b32.xlu0 %v636, %s641
    %v643 = vpop.permute.xlu0 %642
    %s645 = sor.u32 256, 16
    %646 = vbcast.lane.b32.xlu0 %v636, %s645
    %v647 = vpop.permute.xlu0 %646
    %s649 = sor.u32 256, 24
    %650 = vbcast.lane.b32.xlu0 %v636, %s649
    %v651 = vpop.permute.xlu0 %650
    %v660 = vmul.f32 %v609, %v620
    %v661 = vmul.f32 %v609, %v624
    %v662 = vmul.f32 %v609, %v628
    %v663 = vmul.f32 %v609, %v632
    %v664 = vmul.f32 %v613, %v639
    %v665 = vmul.f32 %v613, %v643
    %v666 = vmul.f32 %v613, %v647
    %v667 = vmul.f32 %v613, %v651
    %v668 = vadd.f32 %v598, %v660
    %v669 = vadd.f32 %v599, %v661
    %v670 = vadd.f32 %v600, %v662
    %v671 = vadd.f32 %v601, %v663
    %v672 = vadd.f32 %v602, %v664
    %v673 = vadd.f32 %v603, %v665
    %v674 = vadd.f32 %v604, %v666
    %v675 = vadd.f32 %v605, %v667
    %v676 = vlaneseq
    %v677 = vshrl.u32 %v676, 7
    %v678 = vsub.s32 6, %v677
    %v679 = vrot.slane %v253, %v678
    %v680 = vlaneseq
    %v681 = vshrl.u32 %v680, 7
    %v682 = vsub.s32 6, %v681
    %v683 = vrot.slane %v255, %v682
    %v684 = vlaneseq
    %v685 = vshrl.u32 %v684, 7
    %v686 = vsub.s32 6, %v685
    %v687 = vrot.slane %v72, %v686
    %689 = vbcast.lane.b32.xlu0 %v687, 256
    %v690 = vpop.permute.xlu0 %689
    %s692 = sor.u32 256, 8
    %693 = vbcast.lane.b32.xlu0 %v687, %s692
    %v694 = vpop.permute.xlu0 %693
    %s696 = sor.u32 256, 16
    %697 = vbcast.lane.b32.xlu0 %v687, %s696
    %v698 = vpop.permute.xlu0 %697
    %s700 = sor.u32 256, 24
    %701 = vbcast.lane.b32.xlu0 %v687, %s700
    %v702 = vpop.permute.xlu0 %701
    %v703 = vlaneseq
    %v704 = vshrl.u32 %v703, 7
    %v705 = vsub.s32 6, %v704
    %v706 = vrot.slane %v73, %v705
    %708 = vbcast.lane.b32.xlu0 %v706, 256
    %v709 = vpop.permute.xlu0 %708
    %s711 = sor.u32 256, 8
    %712 = vbcast.lane.b32.xlu0 %v706, %s711
    %v713 = vpop.permute.xlu0 %712
    %s715 = sor.u32 256, 16
    %716 = vbcast.lane.b32.xlu0 %v706, %s715
    %v717 = vpop.permute.xlu0 %716
    %s719 = sor.u32 256, 24
    %720 = vbcast.lane.b32.xlu0 %v706, %s719
    %v721 = vpop.permute.xlu0 %720
    %v730 = vmul.f32 %v679, %v690
    %v731 = vmul.f32 %v679, %v694
    %v732 = vmul.f32 %v679, %v698
    %v733 = vmul.f32 %v679, %v702
    %v734 = vmul.f32 %v683, %v709
    %v735 = vmul.f32 %v683, %v713
    %v736 = vmul.f32 %v683, %v717
    %v737 = vmul.f32 %v683, %v721
    %v738 = vadd.f32 %v668, %v730
    %v739 = vadd.f32 %v669, %v731
    %v740 = vadd.f32 %v670, %v732
    %v741 = vadd.f32 %v671, %v733
    %v742 = vadd.f32 %v672, %v734
    %v743 = vadd.f32 %v673, %v735
    %v744 = vadd.f32 %v674, %v736
    %v745 = vadd.f32 %v675, %v737
    %v746 = vlaneseq
    %v747 = vshrl.u32 %v746, 7
    %v748 = vsub.s32 7, %v747
    %v749 = vrot.slane %v253, %v748
    %v750 = vlaneseq
    %v751 = vshrl.u32 %v750, 7
    %v752 = vsub.s32 7, %v751
    %v753 = vrot.slane %v255, %v752
    %v754 = vlaneseq
    %v755 = vshrl.u32 %v754, 7
    %v756 = vsub.s32 7, %v755
    %v757 = vrot.slane %v72, %v756
    %759 = vbcast.lane.b32.xlu0 %v757, 256
    %v760 = vpop.permute.xlu0 %759
    %s762 = sor.u32 256, 8
    %763 = vbcast.lane.b32.xlu0 %v757, %s762
    %v764 = vpop.permute.xlu0 %763
    %s766 = sor.u32 256, 16
    %767 = vbcast.lane.b32.xlu0 %v757, %s766
    %v768 = vpop.permute.xlu0 %767
    %s770 = sor.u32 256, 24
    %771 = vbcast.lane.b32.xlu0 %v757, %s770
    %v772 = vpop.permute.xlu0 %771
    %v773 = vlaneseq
    %v774 = vshrl.u32 %v773, 7
    %v775 = vsub.s32 7, %v774
    %v776 = vrot.slane %v73, %v775
    %778 = vbcast.lane.b32.xlu0 %v776, 256
    %v779 = vpop.permute.xlu0 %778
    %s781 = sor.u32 256, 8
    %782 = vbcast.lane.b32.xlu0 %v776, %s781
    %v783 = vpop.permute.xlu0 %782
    %s785 = sor.u32 256, 16
    %786 = vbcast.lane.b32.xlu0 %v776, %s785
    %v787 = vpop.permute.xlu0 %786
    %s789 = sor.u32 256, 24
    %790 = vbcast.lane.b32.xlu0 %v776, %s789
    %v791 = vpop.permute.xlu0 %790
    %v800 = vmul.f32 %v749, %v760
    %v801 = vmul.f32 %v749, %v764
    %v802 = vmul.f32 %v749, %v768
    %v803 = vmul.f32 %v749, %v772
    %v804 = vmul.f32 %v753, %v779
    %v805 = vmul.f32 %v753, %v783
    %v806 = vmul.f32 %v753, %v787
    %v807 = vmul.f32 %v753, %v791
    %v808 = vadd.f32 %v738, %v800
    %v809 = vadd.f32 %v739, %v801
    %v810 = vadd.f32 %v740, %v802
    %v811 = vadd.f32 %v741, %v803
    %v812 = vadd.f32 %v742, %v804
    %v813 = vadd.f32 %v743, %v805
    %v814 = vadd.f32 %v744, %v806
    %v815 = vadd.f32 %v745, %v807
    %v816 = vld [vmem:[#allocation8] sm:$0xff]
    %v817 = vld [vmem:[#allocation8 + $0x8] sm:$0xff]
    %v818 = vld [vmem:[#allocation8 + $0x10] sm:$0xff]
    %v819 = vld [vmem:[#allocation8 + $0x18] sm:$0xff]
    %v820 = vld [vmem:[%s5] sm:$0x1]
    %v822 = vlaneseq
    %v823 = vshrl.u32 %v822, 7
    %v824 = vsub.s32 0, %v823
    %v825 = vrot.slane %v820, %v824
    %835 = vset.pattern.permute.xlu0 0
    %836 = vperm.xlu0 %835, %v808
    %v837 = vpop.permute.xlu0 %836
    %838 = vset.pattern.permute.xlu0 0
    %839 = vperm.xlu0 %838, %v809
    %v840 = vpop.permute.xlu0 %839
    %841 = vset.pattern.permute.xlu0 0
    %842 = vperm.xlu0 %841, %v810
    %v843 = vpop.permute.xlu0 %842
    %844 = vset.pattern.permute.xlu0 0
    %845 = vperm.xlu0 %844, %v811
    %v846 = vpop.permute.xlu0 %845
    %847 = vset.pattern.permute.xlu0 0
    %848 = vperm.xlu0 %847, %v812
    %v849 = vpop.permute.xlu0 %848
    %850 = vset.pattern.permute.xlu0 0
    %851 = vperm.xlu0 %850, %v813
    %v852 = vpop.permute.xlu0 %851
    %853 = vset.pattern.permute.xlu0 0
    %854 = vperm.xlu0 %853, %v814
    %v855 = vpop.permute.xlu0 %854
    %856 = vset.pattern.permute.xlu0 0
    %857 = vperm.xlu0 %856, %v815
    %v858 = vpop.permute.xlu0 %857
    %v859 = vlaneseq
    %v860 = vshrl.u32 %v859, 7
    %v861 = vsub.s32 %v187, %v860
    %v862 = vrot.slane %v837, %v861
    %v863 = vadd.s32 %v187, 4294967288
    %v864 = vlaneseq
    %v865 = vshrl.u32 %v864, 7
    %v866 = vsub.s32 %v863, %v865
    %v867 = vrot.slane %v840, %v866
    %vm868 = vcmask 130112
    %v869 = vsel %vm868, %v867, %v862
    %v870 = vadd.s32 %v187, 4294967280
    %v871 = vlaneseq
    %v872 = vshrl.u32 %v871, 7
    %v873 = vsub.s32 %v870, %v872
    %v874 = vrot.slane %v843, %v873
    %vm875 = vcmask 195712
    %v876 = vsel %vm875, %v874, %v869
    %v877 = vadd.s32 %v187, 4294967272
    %v878 = vlaneseq
    %v879 = vshrl.u32 %v878, 7
    %v880 = vsub.s32 %v877, %v879
    %v881 = vrot.slane %v846, %v880
    %vm882 = vcmask 261312
    %v883 = vsel %vm882, %v881, %v876
    %v884 = vlaneseq
    %v885 = vshrl.u32 %v884, 7
    %v886 = vsub.s32 %v187, %v885
    %v887 = vrot.slane %v849, %v886
    %v888 = vlaneseq
    %v889 = vshrl.u32 %v888, 7
    %v890 = vsub.s32 %v863, %v889
    %v891 = vrot.slane %v852, %v890
    %v892 = vsel %vm868, %v891, %v887
    %v893 = vlaneseq
    %v894 = vshrl.u32 %v893, 7
    %v895 = vsub.s32 %v870, %v894
    %v896 = vrot.slane %v855, %v895
    %v897 = vsel %vm875, %v896, %v892
    %v898 = vlaneseq
    %v899 = vshrl.u32 %v898, 7
    %v900 = vsub.s32 %v877, %v899
    %v901 = vrot.slane %v858, %v900
    %v902 = vsel %vm882, %v901, %v897
    %v903 = vsel %vm196, %v902, %v883
    %v904 = vsel %vm85, %v903, 0
    %906 = vmatprep.subr.mxu0 0.0
    %907 = vmatpush1.msra.mxu0 0.0
    %908 = vmatprep.subr.mxu0 0.0
    %909 = vmatpush1.msra.mxu0 0.0
    %910 = vmatprep.subr.mxu0 0.0
    %911 = vmatpush1.msra.mxu0 0.0
    %912 = vmatprep.subr.mxu0 0.0
    %913 = vmatpush1.msra.mxu0 0.0
    %914 = vmatprep.subr.mxu0 0.0
    %915 = vmatpush1.msra.mxu0 0.0
    %916 = vmatprep.subr.mxu0 0.0
    %917 = vmatpush1.msra.mxu0 0.0
    %918 = vmatprep.subr.mxu0 0.0
    %919 = vmatpush1.msra.mxu0 0.0
    %920 = vmatprep.subr.mxu0 0.0
    %921 = vmatpush1.msra.mxu0 0.0
    %922 = vmatprep.subr.mxu0 0.0
    %923 = vmatpush1.msra.mxu0 0.0
    %924 = vmatprep.subr.mxu0 0.0
    %925 = vmatpush1.msra.mxu0 0.0
    %926 = vmatprep.subr.mxu0 0.0
    %927 = vmatpush1.msra.mxu0 0.0
    %928 = vmatprep.subr.mxu0 0.0
    %929 = vmatpush1.msra.mxu0 0.0
    %930 = vmatprep.subr.mxu0 0.0
    %931 = vmatpush1.msra.mxu0 %v819
    %932 = vmatprep.subr.mxu0 0.0
    %933 = vmatpush1.msra.mxu0 %v818
    %934 = vmatprep.subr.mxu0 0.0
    %935 = vmatpush1.msra.mxu0 %v817
    %936 = vmatprep.subr.mxu0 0.0
    %937 = vmatpush1.msra.mxu0 %v816
    %938 = vmatprep.subr.mxu0 0.0
    %939 = vmatpush2.msra.mxu0 0.0
    %940 = vmatprep.subr.mxu0 0.0
    %941 = vmatpush2.msra.mxu0 0.0
    %942 = vmatprep.subr.mxu0 0.0
    %943 = vmatpush2.msra.mxu0 0.0
    %944 = vmatprep.subr.mxu0 0.0
    %945 = vmatpush2.msra.mxu0 0.0
    %946 = vmatprep.subr.mxu0 0.0
    %947 = vmatpush2.msra.mxu0 0.0
    %948 = vmatprep.subr.mxu0 0.0
    %949 = vmatpush2.msra.mxu0 0.0
    %950 = vmatprep.subr.mxu0 0.0
    %951 = vmatpush2.msra.mxu0 0.0
    %952 = vmatprep.subr.mxu0 0.0
    %953 = vmatpush2.msra.mxu0 0.0
    %954 = vmatprep.subr.mxu0 0.0
    %955 = vmatpush2.msra.mxu0 0.0
    %956 = vmatprep.subr.mxu0 0.0
    %957 = vmatpush2.msra.mxu0 0.0
    %958 = vmatprep.subr.mxu0 0.0
    %959 = vmatpush2.msra.mxu0 0.0
    %960 = vmatprep.subr.mxu0 0.0
    %961 = vmatpush2.msra.mxu0 0.0
    %962 = vmatprep.subr.mxu0 0.0
    %963 = vmatpush2.msra.mxu0 0.0
    %964 = vmatprep.subr.mxu0 0.0
    %965 = vmatpush2.msra.mxu0 0.0
    %966 = vmatprep.subr.mxu0 0.0
    %967 = vmatpush2.msra.mxu0 0.0
    %968 = vmatprep.subr.mxu0 0.0
    %969 = vmatpush2.msra.mxu0 0.0
    %970 = vmatprep.mubr.f32.mxu0 0.0
    %971 = vmatmul.mubr.f32.gmra.mxu0 %v904
    %v972 = vpop.f32.mrf.mxu0
    %v973 = vadd.f32 %v825, %v972
    %v974 = vpop.f32.mrf.mxu0
    %975 = vdwg.mxu0
    %v976 = vmax.f32 %v973, 0.0
    %v977 = vld [vmem:[%s6] sm:$0x1]
    %v979 = vlaneseq
    %v980 = vshrl.u32 %v979, 7
    %v981 = vsub.s32 0, %v980
    %v982 = vrot.slane %v977, %v981
    %v984 = vmul.f32 %v976, %v982
    %vm985 = vcmask 254976
    %v986 = vsel %vm985, %v984, 0.0
    %987 = vadd.xlane.f32.xlu0 %v986
    %v988 = vpop.xlane.xlu0 %987
    %s989 = sld [smem:[#allocation2]]
    %v990 = vstv %s989
    %v991 = vadd.f32 %v988, %v990
    %v993 = vlaneseq
    %v994 = vshrl.u32 %v993, 7
    %v995 = vsub.s32 %v187, %v994
    %v996 = vrot.slane %v991, %v995
    %vm998 = vcmask 8192
    %999 = vst.msk [vmem:[#allocation9] sm:$0x1] %vm998, %v996
    // Predicated region
    $region46: #{tpu_custom_call.1} parent=1 // pred_check
      _
    $region47: #{tpu_custom_call.1} parent=1 // pred_check_branch
      %1001 = sbr.rel (0) target = $region49
    $region48: #{tpu_custom_call.1} parent=1 // pred_region
      %s1003 = ssub.s32 16, 16
      %1004 = vsyncadd [#allocation5], %s1003
      %s1006 = sshll.u32 [#allocation9], 4
      %s1007 = int_to_ptr.vmem [resolvable:$true] %s1006
      %1009 = dma.vmem_to_hbm [thread:$0]  %s1007, 16, %s8, [#allocation5]
    $region49: #{tpu_custom_call.1} parent=1 // pred_fallthru
      _
    // Predicated region
    $region50: #{tpu_custom_call.1} parent=1 // pred_check
      _
    $region51: #{tpu_custom_call.1} parent=1 // pred_check_branch
      %1011 = sbr.rel (0) target = $region53
    $region52: #{tpu_custom_call.1} parent=1 // pred_region
      %1012 = dma.done [#allocation5], 16
    $region53: #{tpu_custom_call.1} parent=1 // pred_fallthru
      _
    %1013 = vsyncpa [#allocation4], 1
    %1014 = vsyncpa [#allocation7], 1
    %1015 = vsyncpa [#allocation5], 1

</llo_original>
